<compile_context>
chip_gen: v7x
topology: tpu7x:2x2x1
jax: 0.10.0
libtpu: 0.0.40
codegen_flags: <defaults>
</compile_context>

<pallas_src>
import functools

import jax
import jax.numpy as jnp
from jax import lax
from jax.experimental import pallas as pl
from jax.experimental.pallas import tpu as pltpu


def _round_up(x, m):
    return (x + m - 1) // m * m


def residual_block_kernel(x_ref, w1_ref, b1_ref, w2s_ref, b2_ref, w3_ref, b3_ref,
                          out_ref, buf_ref, *, H, W, Cp, off):
    # x_ref:   (b_tile, Cin, H*W)   pixels on the lane axis (NCHW flattened)
    # w1_ref:  (Cp, Cin)            1x1 conv (BN1 scale folded), padded to Cp rows
    # w2s_ref: (9*Cp, Cp)           all nine 3x3 taps stacked (BN2 scale folded)
    # w3_ref:  (Cin, Cp)            1x1 conv (BN3 scale folded)
    # b*_ref:  (Cp or Cin, 1)       folded BatchNorm shifts (column vectors, broadcast on lanes)
    # buf_ref: (9*Cp, L)            lane-haloed staging buffer for the shifted tap reads
    HW = H * W
    rows = buf_ref.shape[0]
    L = buf_ref.shape[1]

    # Zero only the lane halos actually read by the shifted taps (head/tail, 128 lanes each,
    # aligned unmasked stores).  Re-done every grid step so the "parallel" batch axis stays
    # correct when the grid is split across TensorCores.  The image region [off, off+HW) is
    # fully overwritten for every image, so the halos stay zero across the b_tile loop.
    buf_ref[:, 0:off] = jnp.zeros((rows, off), jnp.float32)
    buf_ref[:, off + HW:L] = jnp.zeros((rows, L - off - HW), jnp.float32)

    # Column index per output pixel (lane-wise); masks cancel horizontal wrap-around.
    col = lax.broadcasted_iota(jnp.int32, (1, HW), 1) % W
    not_left = col != 0          # dx=0 taps read column c-1 -> invalid at c == 0
    not_right = col != W - 1     # dx=2 taps read column c+1 -> invalid at c == W-1

    b_tile = x_ref.shape[0]
    # TODO(synk): for large b_tile use a fori_loop / extra grid axis to bound live ranges.
    for i in range(b_tile):
        x2d = x_ref[i].astype(jnp.float32)                                   # (Cin, HW)

        # --- conv1: 1x1 (Cin -> C) with folded BN1 scale, + BN1 shift ---
        y1 = jnp.dot(w1_ref[...], x2d, preferred_element_type=jnp.float32) + b1_ref[...]

        # --- conv2: 3x3 same zero-padding (C -> C), folded BN2 scale ---
        # One stacked matmul computes every tap's 1x1 product: U[t*Cp:(t+1)*Cp] = W2[t] @ y1.
        u = jnp.dot(w2s_ref[...], y1, preferred_element_type=jnp.float32)    # (9*Cp, HW)
        buf_ref[:, off:off + HW] = u                                         # aligned store

        # Tap (dy, dx) for output pixel p is buf[t*Cp:(t+1)*Cp, off + p + (dy-1)*W + (dx-1)]:
        # vertical out-of-image reads land in the zero lane halos; horizontal wrap-around
        # across image rows is cancelled by masking output columns 0 / W-1.
        acc = None
        for dx in range(3):
            g = None
            for dy in range(3):
                t = dy * 3 + dx
                s = off + (dy - 1) * W + (dx - 1)
                tap = buf_ref[t * Cp:(t + 1) * Cp, s:s + HW]                 # (Cp, HW)
                g = tap if g is None else g + tap
            if dx == 0:
                g = jnp.where(not_left, g, 0.0)
            elif dx == 2:
                g = jnp.where(not_right, g, 0.0)
            acc = g if acc is None else acc + g
        y2 = acc + b2_ref[...]                                               # (Cp, HW)

        # --- conv3: 1x1 (C -> Cin) with folded BN3 scale, + BN3 shift ---
        y3 = jnp.dot(w3_ref[...], y2, preferred_element_type=jnp.float32) + b3_ref[...]

        # --- residual add + ReLU, lane-dense (Cin, HW) output slab ---
        out_ref[i] = jnp.maximum(y3 + x2d, 0.0).astype(out_ref.dtype)


def residual_block(x_nchw, w1, s1, b1, w2, s2, b2, w3, s3, b3, *, b_tile=None):
    """x_nchw: (N, Cin, H, W); conv weights in PyTorch OIHW layout; s*/b* are folded BN
    per-channel scale/shift (inference mode)."""
    N, Cin, H, W = x_nchw.shape
    C = w1.shape[0]
    HW = H * W
    Cp = _round_up(C, 8)       # pad the bottleneck channel dim to a full sublane tile (exact)

    if b_tile is None:
        # Keep exactly two "parallel" grid steps when possible: both v7x TensorCores get work,
        # and per-grid-step overhead is amortized over N/2 images on v5e/v6e.
        b_tile = N // 2 if (N % 2 == 0 and N >= 2) else 1
    assert N % b_tile == 0

    # Fold inference-BN scales into the conv weights (exact): s*(W@x) + b == (s[:,None]*W)@x + b.
    w1_2d = w1[:, :, 0, 0].astype(jnp.float32)        # (C, Cin)
    w3_2d = w3[:, :, 0, 0].astype(jnp.float32)        # (Cin, C)
    w1f = jnp.zeros((Cp, Cin), jnp.float32).at[:C].set(w1_2d * s1[:, None])
    b1f = jnp.zeros((Cp, 1), jnp.float32).at[:C, 0].set(b1)
    w2s = jnp.zeros((9 * Cp, Cp), jnp.float32)
    for dy in range(3):
        for dx in range(3):
            t = dy * 3 + dx
            w2s = w2s.at[t * Cp:t * Cp + C, :C].set(
                w2[:, :, dy, dx].astype(jnp.float32) * s2[:, None])
    b2f = jnp.zeros((Cp, 1), jnp.float32).at[:C, 0].set(b2)
    w3f = jnp.zeros((Cin, Cp), jnp.float32).at[:, :C].set(w3_2d * s3[:, None])
    b3f = b3.reshape(Cin, 1).astype(jnp.float32)

    # Pixels-on-lanes: NCHW -> (N, Cin, H*W) is a free trailing-dim reshape.
    x_flat = x_nchw.reshape(N, Cin, HW)

    off = 128                                   # lane-aligned halo -> unmasked staging store
    assert off >= W + 1, "halo must cover one image row + 1 pixel"
    L = off + _round_up(HW + W + 1, 128)        # head halo | image | tail halo

    kernel = functools.partial(residual_block_kernel, H=H, W=W, Cp=Cp, off=off)
    const = lambda shape: pl.BlockSpec(shape, lambda n: (0,) * len(shape))

    out_flat = pl.pallas_call(
        kernel,
        out_shape=jax.ShapeDtypeStruct((N, Cin, HW), x_nchw.dtype),
        grid_spec=pltpu.PrefetchScalarGridSpec(
            num_scalar_prefetch=0,
            grid=(N // b_tile,),
            in_specs=[
                pl.BlockSpec((b_tile, Cin, HW), lambda n: (n, 0, 0)),   # x (pixels on lanes)
                const((Cp, Cin)),       # w1 (BN1-folded, Cp-padded)
                const((Cp, 1)),         # b1
                const((9 * Cp, Cp)),    # w2 stacked taps (BN2-folded)
                const((Cp, 1)),         # b2
                const((Cin, Cp)),       # w3 (BN3-folded)
                const((Cin, 1)),        # b3
            ],
            out_specs=pl.BlockSpec((b_tile, Cin, HW), lambda n: (n, 0, 0)),
            scratch_shapes=[pltpu.VMEM((9 * Cp, L), jnp.float32)],
        ),
        compiler_params=pltpu.CompilerParams(
            dimension_semantics=("parallel",)),
    )(x_flat, w1f, b1f, w2s, b2f, w3f, b3f)

    return out_flat.reshape(N, Cin, H, W)


def reference_nchw(x, w1, s1, b1, w2, s2, b2, w3, s3, b3):
    dn = ("NCHW", "OIHW", "NCHW")
    bn = lambda y, s, b: y * s[None, :, None, None] + b[None, :, None, None]
    y = lax.conv_general_dilated(x, w1, (1, 1), "VALID", dimension_numbers=dn)
    y = bn(y, s1, b1)
    y = lax.conv_general_dilated(y, w2, (1, 1), "SAME", dimension_numbers=dn)
    y = bn(y, s2, b2)
    y = lax.conv_general_dilated(y, w3, (1, 1), "VALID", dimension_numbers=dn)
    y = bn(y, s3, b3)
    return jnp.maximum(y + x, 0.0)


def fold_bn(gamma, beta, mean, var, eps=1e-5):
    scale = gamma / jnp.sqrt(var + eps)
    shift = beta - mean * scale
    return scale, shift


if __name__ == "__main__":
    channels, expansion = 4, 4
    N, H, W = 2, 16, 16
    Cin = channels * expansion   # 16

    key = jax.random.PRNGKey(0)
    ks = jax.random.split(key, 16)

    # input in PyTorch NCHW convention (used directly; no layout transpose needed)
    x = jax.random.normal(ks[0], (N, Cin, H, W), jnp.float32)

    # conv weights in PyTorch OIHW layout (bias=False, matching the module)
    w1 = jax.random.normal(ks[1], (channels, Cin, 1, 1), jnp.float32) * 0.1   # 1x1: Cin -> C
    w2 = jax.random.normal(ks[2], (channels, channels, 3, 3), jnp.float32) * 0.1  # 3x3: C -> C
    w3 = jax.random.normal(ks[3], (Cin, channels, 1, 1), jnp.float32) * 0.1   # 1x1: C -> Cin

    # BatchNorm (inference) parameters, folded into per-channel scale/shift
    s1, b1 = fold_bn(1.0 + 0.1 * jax.random.normal(ks[4], (channels,)),
                     0.1 * jax.random.normal(ks[5], (channels,)),
                     0.1 * jax.random.normal(ks[6], (channels,)),
                     jnp.abs(jax.random.normal(ks[7], (channels,))) + 0.5)
    s2, b2 = fold_bn(1.0 + 0.1 * jax.random.normal(ks[8], (channels,)),
                     0.1 * jax.random.normal(ks[9], (channels,)),
                     0.1 * jax.random.normal(ks[10], (channels,)),
                     jnp.abs(jax.random.normal(ks[11], (channels,))) + 0.5)
    s3, b3 = fold_bn(1.0 + 0.1 * jax.random.normal(ks[12], (Cin,)),
                     0.1 * jax.random.normal(ks[13], (Cin,)),
                     0.1 * jax.random.normal(ks[14], (Cin,)),
                     jnp.abs(jax.random.normal(ks[15], (Cin,))) + 0.5)

    out = residual_block(x, w1, s1, b1, w2, s2, b2, w3, s3, b3)
    out = jax.block_until_ready(out)

    ref = reference_nchw(x, w1, s1, b1, w2, s2, b2, w3, s3, b3)
    assert jnp.allclose(out, ref, atol=1e-4, rtol=1e-4), "mismatch vs reference"

    print("KERNEL_OK")
</pallas_src>

<mosaic_0001>
module attributes {stable_mosaic.version = 11 : i64} {
  func.func @residual_block_kernel(%arg0: i32, %arg1: memref<1x16x256xf32, #tpu.memory_space<vmem>>, %arg2: memref<8x16xf32, #tpu.memory_space<vmem>>, %arg3: memref<8x1xf32, #tpu.memory_space<vmem>>, %arg4: memref<72x8xf32, #tpu.memory_space<vmem>>, %arg5: memref<8x1xf32, #tpu.memory_space<vmem>>, %arg6: memref<16x8xf32, #tpu.memory_space<vmem>>, %arg7: memref<16x1xf32, #tpu.memory_space<vmem>>, %arg8: memref<1x16x256xf32, #tpu.memory_space<vmem>>, %arg9: memref<72x512xf32, #tpu.memory_space<vmem>>) attributes {dimension_semantics = [#tpu.dimension_semantics<parallel>], iteration_bounds = array<i64: 2>, scalar_prefetch = 0 : i64, scratch_operands = 1 : i64, tpu.core_type = #tpu.core_type<tc>, window_params = [{transform_indices = @transform_0, window_bounds = array<i64: 1, 16, 256>}, {pipeline_mode = #tpu.pipeline_mode<synchronous>, transform_indices = @transform_1, window_bounds = array<i64: 8, 16>}, {pipeline_mode = #tpu.pipeline_mode<synchronous>, transform_indices = @transform_2, window_bounds = array<i64: 8, 1>}, {pipeline_mode = #tpu.pipeline_mode<synchronous>, transform_indices = @transform_3, window_bounds = array<i64: 72, 8>}, {pipeline_mode = #tpu.pipeline_mode<synchronous>, transform_indices = @transform_4, window_bounds = array<i64: 8, 1>}, {pipeline_mode = #tpu.pipeline_mode<synchronous>, transform_indices = @transform_5, window_bounds = array<i64: 16, 8>}, {pipeline_mode = #tpu.pipeline_mode<synchronous>, transform_indices = @transform_6, window_bounds = array<i64: 16, 1>}, {transform_indices = @transform_7, window_bounds = array<i64: 1, 16, 256>}]} {
    %cst = arith.constant 0.000000e+00 : f32
    %0 = vector.broadcast %cst : f32 to vector<72x128xf32>
    %c0 = arith.constant 0 : index
    %c0_0 = arith.constant 0 : index
    %1 = vector.load %arg9[%c0, %c0_0] : memref<72x512xf32, #tpu.memory_space<vmem>>, vector<72x128xf32>
    tpu.vector_store %arg9[%c0, %c0_0], %0 {strides = array<i32>} : memref<72x512xf32, #tpu.memory_space<vmem>>, vector<72x128xf32>,
    %cst_1 = arith.constant 0.000000e+00 : f32
    %2 = vector.broadcast %cst_1 : f32 to vector<72x128xf32>
    %c0_2 = arith.constant 0 : index
    %c384 = arith.constant 384 : index
    %3 = vector.load %arg9[%c0_2, %c384] : memref<72x512xf32, #tpu.memory_space<vmem>>, vector<72x128xf32>
    tpu.vector_store %arg9[%c0_2, %c384], %2 {strides = array<i32>} : memref<72x512xf32, #tpu.memory_space<vmem>>, vector<72x128xf32>,
    %4 = tpu.iota {dimensions = array<i32: 1>} : vector<1x256xi32>
    %c16_i32 = arith.constant 16 : i32
    %c0_i32 = arith.constant 0 : i32
    %5 = arith.cmpi eq, %c16_i32, %c0_i32 : i32
    %c1_i32 = arith.constant 1 : i32
    %6 = arith.select %5, %c1_i32, %c16_i32 : i32
    %7 = vector.broadcast %6 : i32 to vector<1x256xi32>
    %8 = arith.remsi %4, %7 : vector<1x256xi32>
    %c0_i32_3 = arith.constant 0 : i32
    %9 = vector.broadcast %c0_i32_3 : i32 to vector<1x256xi32>
    %10 = arith.cmpi ne, %8, %9 : vector<1x256xi32>
    %c0_i32_4 = arith.constant 0 : i32
    %11 = vector.broadcast %c0_i32_4 : i32 to vector<1x256xi32>
    %12 = arith.cmpi slt, %8, %11 : vector<1x256xi32>
    %c0_i32_5 = arith.constant 0 : i32
    %13 = arith.cmpi slt, %6, %c0_i32_5 : i32
    %14 = vector.broadcast %13 : i1 to vector<1x256xi1>
    %15 = vector.broadcast %14 : vector<1x256xi1> to vector<1x256xi1>
    %16 = arith.xori %12, %15 : vector<1x256xi1>
    %17 = arith.andi %16, %10 : vector<1x256xi1>
    %18 = vector.broadcast %6 : i32 to vector<1x256xi32>
    %19 = arith.addi %8, %18 : vector<1x256xi32>
    %20 = arith.select %17, %19, %8 : vector<1x256xi1>, vector<1x256xi32>
    %c0_i32_6 = arith.constant 0 : i32
    %21 = vector.broadcast %c0_i32_6 : i32 to vector<1x256xi32>
    %22 = arith.cmpi ne, %20, %21 : vector<1x256xi32>
    %c15_i32 = arith.constant 15 : i32
    %23 = vector.broadcast %c15_i32 : i32 to vector<1x256xi32>
    %24 = arith.cmpi ne, %20, %23 : vector<1x256xi32>
    %c0_7 = arith.constant 0 : index
    %c0_8 = arith.constant 0 : index
    %c0_9 = arith.constant 0 : index
    %25 = vector.load %arg1[%c0_7, %c0_8, %c0_9] : memref<1x16x256xf32, #tpu.memory_space<vmem>>, vector<1x16x256xf32>
    %26 = vector.shape_cast %25 : vector<1x16x256xf32> to vector<16x256xf32>
    %c0_10 = arith.constant 0 : index
    %c0_11 = arith.constant 0 : index
    %27 = vector.load %arg2[%c0_10, %c0_11] : memref<8x16xf32, #tpu.memory_space<vmem>>, vector<8x16xf32>
    %cst_12 = arith.constant dense<0.000000e+00> : vector<8x256xf32>
    %28 = tpu.matmul %27, %26, %cst_12 {dimension_numbers = #tpu.dot_dimension_numbers<[1], [0], [0], [1], [0, 0, 1, 1], [], []>} : vector<8x16xf32>, vector<16x256xf32>, vector<8x256xf32> -> vector<8x256xf32>
    %c0_13 = arith.constant 0 : index
    %c0_14 = arith.constant 0 : index
    %29 = vector.load %arg3[%c0_13, %c0_14] : memref<8x1xf32, #tpu.memory_space<vmem>>, vector<8x1xf32>
    %30 = vector.broadcast %29 : vector<8x1xf32> to vector<8x256xf32>
    %31 = arith.addf %28, %30 : vector<8x256xf32>
    %c0_15 = arith.constant 0 : index
    %c0_16 = arith.constant 0 : index
    %32 = vector.load %arg4[%c0_15, %c0_16] : memref<72x8xf32, #tpu.memory_space<vmem>>, vector<72x8xf32>
    %cst_17 = arith.constant dense<0.000000e+00> : vector<72x256xf32>
    %33 = tpu.matmul %32, %31, %cst_17 {dimension_numbers = #tpu.dot_dimension_numbers<[1], [0], [0], [1], [0, 0, 1, 1], [], []>} : vector<72x8xf32>, vector<8x256xf32>, vector<72x256xf32> -> vector<72x256xf32>
    %c0_18 = arith.constant 0 : index
    %c128 = arith.constant 128 : index
    %34 = vector.load %arg9[%c0_18, %c128] : memref<72x512xf32, #tpu.memory_space<vmem>>, vector<72x256xf32>
    tpu.vector_store %arg9[%c0_18, %c128], %33 {strides = array<i32>} : memref<72x512xf32, #tpu.memory_space<vmem>>, vector<72x256xf32>,
    %c0_19 = arith.constant 0 : index
    %c111 = arith.constant 111 : index
    %35 = vector.load %arg9[%c0_19, %c111] : memref<72x512xf32, #tpu.memory_space<vmem>>, vector<8x256xf32>
    %c24 = arith.constant 24 : index
    %c127 = arith.constant 127 : index
    %36 = vector.load %arg9[%c24, %c127] : memref<72x512xf32, #tpu.memory_space<vmem>>, vector<8x256xf32>
    %37 = arith.addf %35, %36 : vector<8x256xf32>
    %c48 = arith.constant 48 : index
    %c143 = arith.constant 143 : index
    %38 = vector.load %arg9[%c48, %c143] : memref<72x512xf32, #tpu.memory_space<vmem>>, vector<8x256xf32>
    %39 = arith.addf %37, %38 : vector<8x256xf32>
    %cst_20 = arith.constant 0.000000e+00 : f32
    %40 = vector.shape_cast %22 : vector<1x256xi1> to vector<1x256xi1>
    %41 = vector.broadcast %40 : vector<1x256xi1> to vector<8x256xi1>
    %42 = vector.broadcast %cst_20 : f32 to vector<8x256xf32>
    %43 = arith.select %41, %39, %42 : vector<8x256xi1>, vector<8x256xf32>
    %c8 = arith.constant 8 : index
    %c112 = arith.constant 112 : index
    %44 = vector.load %arg9[%c8, %c112] : memref<72x512xf32, #tpu.memory_space<vmem>>, vector<8x256xf32>
    %c32 = arith.constant 32 : index
    %c128_21 = arith.constant 128 : index
    %45 = vector.load %arg9[%c32, %c128_21] : memref<72x512xf32, #tpu.memory_space<vmem>>, vector<8x256xf32>
    %46 = arith.addf %44, %45 : vector<8x256xf32>
    %c56 = arith.constant 56 : index
    %c144 = arith.constant 144 : index
    %47 = vector.load %arg9[%c56, %c144] : memref<72x512xf32, #tpu.memory_space<vmem>>, vector<8x256xf32>
    %48 = arith.addf %46, %47 : vector<8x256xf32>
    %49 = arith.addf %43, %48 : vector<8x256xf32>
    %c16 = arith.constant 16 : index
    %c113 = arith.constant 113 : index
    %50 = vector.load %arg9[%c16, %c113] : memref<72x512xf32, #tpu.memory_space<vmem>>, vector<8x256xf32>
    %c40 = arith.constant 40 : index
    %c129 = arith.constant 129 : index
    %51 = vector.load %arg9[%c40, %c129] : memref<72x512xf32, #tpu.memory_space<vmem>>, vector<8x256xf32>
    %52 = arith.addf %50, %51 : vector<8x256xf32>
    %c64 = arith.constant 64 : index
    %c145 = arith.constant 145 : index
    %53 = vector.load %arg9[%c64, %c145] : memref<72x512xf32, #tpu.memory_space<vmem>>, vector<8x256xf32>
    %54 = arith.addf %52, %53 : vector<8x256xf32>
    %cst_22 = arith.constant 0.000000e+00 : f32
    %55 = vector.shape_cast %24 : vector<1x256xi1> to vector<1x256xi1>
    %56 = vector.broadcast %55 : vector<1x256xi1> to vector<8x256xi1>
    %57 = vector.broadcast %cst_22 : f32 to vector<8x256xf32>
    %58 = arith.select %56, %54, %57 : vector<8x256xi1>, vector<8x256xf32>
    %59 = arith.addf %49, %58 : vector<8x256xf32>
    %c0_23 = arith.constant 0 : index
    %c0_24 = arith.constant 0 : index
    %60 = vector.load %arg5[%c0_23, %c0_24] : memref<8x1xf32, #tpu.memory_space<vmem>>, vector<8x1xf32>
    %61 = vector.broadcast %60 : vector<8x1xf32> to vector<8x256xf32>
    %62 = arith.addf %59, %61 : vector<8x256xf32>
    %c0_25 = arith.constant 0 : index
    %c0_26 = arith.constant 0 : index
    %63 = vector.load %arg6[%c0_25, %c0_26] : memref<16x8xf32, #tpu.memory_space<vmem>>, vector<16x8xf32>
    %cst_27 = arith.constant dense<0.000000e+00> : vector<16x256xf32>
    %64 = tpu.matmul %63, %62, %cst_27 {dimension_numbers = #tpu.dot_dimension_numbers<[1], [0], [0], [1], [0, 0, 1, 1], [], []>} : vector<16x8xf32>, vector<8x256xf32>, vector<16x256xf32> -> vector<16x256xf32>
    %c0_28 = arith.constant 0 : index
    %c0_29 = arith.constant 0 : index
    %65 = vector.load %arg7[%c0_28, %c0_29] : memref<16x1xf32, #tpu.memory_space<vmem>>, vector<16x1xf32>
    %66 = vector.broadcast %65 : vector<16x1xf32> to vector<16x256xf32>
    %67 = arith.addf %64, %66 : vector<16x256xf32>
    %68 = arith.addf %67, %26 : vector<16x256xf32>
    %cst_30 = arith.constant 0.000000e+00 : f32
    %69 = vector.broadcast %cst_30 : f32 to vector<16x256xf32>
    %70 = arith.maximumf %68, %69 : vector<16x256xf32>
    %c0_31 = arith.constant 0 : index
    %c0_32 = arith.constant 0 : index
    %c0_33 = arith.constant 0 : index
    %71 = vector.load %arg8[%c0_31, %c0_32, %c0_33] : memref<1x16x256xf32, #tpu.memory_space<vmem>>, vector<1x16x256xf32>
    %72 = vector.shape_cast %71 : vector<1x16x256xf32> to vector<16x256xf32>
    %73 = vector.shape_cast %70 : vector<16x256xf32> to vector<1x16x256xf32>
    tpu.vector_store %arg8[%c0_31, %c0_32, %c0_33], %73 {strides = array<i32>} : memref<1x16x256xf32, #tpu.memory_space<vmem>>, vector<1x16x256xf32>,
    return
  }
  func.func @transform_0(%arg0: i32) -> (i32, i32, i32) {
    %c0_i32 = arith.constant 0 : i32
    %c0_i32_0 = arith.constant 0 : i32
    %c0_i32_1 = arith.constant 0 : i32
    return %arg0, %c0_i32, %c0_i32_0 : i32, i32, i32
  }
  func.func @transform_1(%arg0: i32) -> (i32, i32) {
    %c0_i32 = arith.constant 0 : i32
    %c0_i32_0 = arith.constant 0 : i32
    %c0_i32_1 = arith.constant 0 : i32
    return %c0_i32, %c0_i32_0 : i32, i32
  }
  func.func @transform_2(%arg0: i32) -> (i32, i32) {
    %c0_i32 = arith.constant 0 : i32
    %c0_i32_0 = arith.constant 0 : i32
    %c0_i32_1 = arith.constant 0 : i32
    return %c0_i32, %c0_i32_0 : i32, i32
  }
  func.func @transform_3(%arg0: i32) -> (i32, i32) {
    %c0_i32 = arith.constant 0 : i32
    %c0_i32_0 = arith.constant 0 : i32
    %c0_i32_1 = arith.constant 0 : i32
    return %c0_i32, %c0_i32_0 : i32, i32
  }
  func.func @transform_4(%arg0: i32) -> (i32, i32) {
    %c0_i32 = arith.constant 0 : i32
    %c0_i32_0 = arith.constant 0 : i32
    %c0_i32_1 = arith.constant 0 : i32
    return %c0_i32, %c0_i32_0 : i32, i32
  }
  func.func @transform_5(%arg0: i32) -> (i32, i32) {
    %c0_i32 = arith.constant 0 : i32
    %c0_i32_0 = arith.constant 0 : i32
    %c0_i32_1 = arith.constant 0 : i32
    return %c0_i32, %c0_i32_0 : i32, i32
  }
  func.func @transform_6(%arg0: i32) -> (i32, i32) {
    %c0_i32 = arith.constant 0 : i32
    %c0_i32_0 = arith.constant 0 : i32
    %c0_i32_1 = arith.constant 0 : i32
    return %c0_i32, %c0_i32_0 : i32, i32
  }
  func.func @transform_7(%arg0: i32) -> (i32, i32, i32) {
    %c0_i32 = arith.constant 0 : i32
    %c0_i32_0 = arith.constant 0 : i32
    %c0_i32_1 = arith.constant 0 : i32
    return %arg0, %c0_i32, %c0_i32_0 : i32, i32, i32
  }
}

</mosaic_0001>

<llo_original>
// kernel: tpu_custom_call.1
$region0: #{tpu_custom_call.1}
  #allocation0 [shape = 'u32[]', space=smem, size = 0x4, offset = 0x4, fixed_abs, tag = 'smem constant byte address 0x4 - core index']
  #allocation1 [shape = 'u32[144,128]{1,0:T(1,128)}', space=vmem, size = 0x12000, scoped, tag = 'internal scratch']
  #allocation2 [shape = 'f32[72,512]{1,0:T(8,128)}', space=vmem, size = 0x24000, scoped, tag = 'scratch operand']
  %s0 = inlined_call_operand.vmem [shape: f32[2,16,256], index: 0, kind: input, shape index: {}]
  %s1 = inlined_call_operand.vmem [shape: f32[8,16], index: 1, kind: input, shape index: {}]
  %s2 = inlined_call_operand.vmem [shape: f32[8,1], index: 2, kind: input, shape index: {}]
  %s3 = inlined_call_operand.vmem [shape: f32[72,8], index: 3, kind: input, shape index: {}]
  %s4 = inlined_call_operand.vmem [shape: f32[8,1], index: 4, kind: input, shape index: {}]
  %s5 = inlined_call_operand.vmem [shape: f32[16,8], index: 5, kind: input, shape index: {}]
  %s6 = inlined_call_operand.vmem [shape: f32[16,1], index: 6, kind: input, shape index: {}]
  %s7 = inlined_call_operand.hbm [shape: f32[2,16,256], index: 7, kind: output, shape index: {}]
  %s8 = sld [smem:[#allocation0]]
  $region61: #{tpu_custom_call.1} parent=0
    _
  %s10 = ssub.s32 1, %s8
  %s11 = scalar_select 0, %s10, %s8
  $region1: #{tpu_custom_call.1} parent=0
    #allocation3 [shape = 'u8[32768]{0}', space=vmem, size = 0x8000, scoped, tag = 'output window, operand 0']
    #allocation4 [shape = 's32[2]{0}', space=sflag, size = 0x8, scoped, tag = 'scoped memory for tpu_custom_call.1']
    %12 = vsyncpa [#allocation4], 0
    %s13 = scalar_lea.sflag [#allocation4], 1
    %14 = vsyncpa %s13, 0
    loop: start=0, step=1, limit=4
    $region2: #{tpu_custom_call.1} parent=1 // loop_pre_header
      _
    $region3: #{tpu_custom_call.1} parent=1 // loop_header
      %s16 = sphi 0, %s20
      %p17 = scmp.ge.s32.totalorder %s16, 4
      %s26 = sphi 0, %s28
      %s29 = sphi 0, %s26
      %s30 = sphi 0, %s29
      %s46 = sphi 0, %s30
      %s50 = sphi 0, %s50
      %s52 = sphi 0, %s50
      %s53 = sphi 0, %s52
      %s67 = sphi 0, %s53
      %s71 = sphi 0, %s71
      %s73 = sphi 0, %s71
      %s74 = sphi 0, %s73
      %s88 = sphi 0, %s74
      %s92 = sphi 0, %s92
      %s94 = sphi 0, %s92
      %s95 = sphi 0, %s94
      %s109 = sphi 0, %s95
      %s113 = sphi 0, %s113
      %s115 = sphi 0, %s113
      %s116 = sphi 0, %s115
      %s130 = sphi 0, %s116
      %s134 = sphi 0, %s134
      %s136 = sphi 0, %s134
      %s137 = sphi 0, %s136
      %s151 = sphi 0, %s137
      %s155 = sphi 0, %s155
      %s157 = sphi 0, %s155
      %s158 = sphi 0, %s157
      %s172 = sphi 0, %s158
      %s178 = sphi 0, %s180
      %s181 = sphi 0, %s178
      %s182 = sphi 0, %s181
      %s198 = sphi 0, %s182
    $region4: #{tpu_custom_call.1} parent=1 // loop_header_branch
      %19 = sbr.rel (%p17) target = $region8
    $region5: #{tpu_custom_call.1} parent=1 // loop_body
      %s21 = ssub.s32 %s16, 1
      %s22 = ssub.s32 %s16, 2
      %s23 = sadd.s32 %s16, 1
      %s24 = ssub.s32 %s16, %s23
      %p25 = scmp.eq.s32.totalorder %s24, 0
      %s27 = sadd.s32 %s26, 1
      %s28 = scalar_select %p25, %s26, %s27
      %p31 = pneg %p25
      %p32 = scmp.eq.s32.totalorder %s16, 1
      %p33 = por %p31, %p32
      %p34 = scmp.ne.s32.totalorder %s26, %s29
      %p35 = scmp.eq.s32.totalorder %s16, 0
      %p36 = por %p34, %p35
      %p37 = scmp.ne.s32.totalorder %s26, %s29
      %p38 = scmp.eq.s32.totalorder %s21, 1
      %p39 = por %p37, %p38
      %p40 = scmp.ne.s32.totalorder %s29, %s30
      %p41 = scmp.eq.s32.totalorder %s21, 0
      %p42 = por %p40, %p41
      %p43 = scmp.ne.s32.totalorder %s29, %s30
      %p44 = scmp.eq.s32.totalorder %s22, 1
      %p45 = por %p43, %p44
      %p47 = scmp.ne.s32.totalorder %s30, %s46
      %p48 = scmp.eq.s32.totalorder %s22, 0
      %p49 = por %p47, %p48
      %s51 = sadd.s32 %s50, 1
      %p54 = scmp.eq.s32.totalorder %s16, 1
      %p55 = scmp.ne.s32.totalorder %s50, %s52
      %p56 = scmp.eq.s32.totalorder %s16, 0
      %p57 = por %p55, %p56
      %p58 = scmp.ne.s32.totalorder %s50, %s52
      %p59 = scmp.eq.s32.totalorder %s21, 1
      %p60 = por %p58, %p59
      %p61 = scmp.ne.s32.totalorder %s52, %s53
      %p62 = scmp.eq.s32.totalorder %s21, 0
      %p63 = por %p61, %p62
      %p64 = scmp.ne.s32.totalorder %s52, %s53
      %p65 = scmp.eq.s32.totalorder %s22, 1
      %p66 = por %p64, %p65
      %p68 = scmp.ne.s32.totalorder %s53, %s67
      %p69 = scmp.eq.s32.totalorder %s22, 0
      %p70 = por %p68, %p69
      %s72 = sadd.s32 %s71, 1
      %p75 = scmp.eq.s32.totalorder %s16, 1
      %p76 = scmp.ne.s32.totalorder %s71, %s73
      %p77 = scmp.eq.s32.totalorder %s16, 0
      %p78 = por %p76, %p77
      %p79 = scmp.ne.s32.totalorder %s71, %s73
      %p80 = scmp.eq.s32.totalorder %s21, 1
      %p81 = por %p79, %p80
      %p82 = scmp.ne.s32.totalorder %s73, %s74
      %p83 = scmp.eq.s32.totalorder %s21, 0
      %p84 = por %p82, %p83
      %p85 = scmp.ne.s32.totalorder %s73, %s74
      %p86 = scmp.eq.s32.totalorder %s22, 1
      %p87 = por %p85, %p86
      %p89 = scmp.ne.s32.totalorder %s74, %s88
      %p90 = scmp.eq.s32.totalorder %s22, 0
      %p91 = por %p89, %p90
      %s93 = sadd.s32 %s92, 1
      %p96 = scmp.eq.s32.totalorder %s16, 1
      %p97 = scmp.ne.s32.totalorder %s92, %s94
      %p98 = scmp.eq.s32.totalorder %s16, 0
      %p99 = por %p97, %p98
      %p100 = scmp.ne.s32.totalorder %s92, %s94
      %p101 = scmp.eq.s32.totalorder %s21, 1
      %p102 = por %p100, %p101
      %p103 = scmp.ne.s32.totalorder %s94, %s95
      %p104 = scmp.eq.s32.totalorder %s21, 0
      %p105 = por %p103, %p104
      %p106 = scmp.ne.s32.totalorder %s94, %s95
      %p107 = scmp.eq.s32.totalorder %s22, 1
      %p108 = por %p106, %p107
      %p110 = scmp.ne.s32.totalorder %s95, %s109
      %p111 = scmp.eq.s32.totalorder %s22, 0
      %p112 = por %p110, %p111
      %s114 = sadd.s32 %s113, 1
      %p117 = scmp.eq.s32.totalorder %s16, 1
      %p118 = scmp.ne.s32.totalorder %s113, %s115
      %p119 = scmp.eq.s32.totalorder %s16, 0
      %p120 = por %p118, %p119
      %p121 = scmp.ne.s32.totalorder %s113, %s115
      %p122 = scmp.eq.s32.totalorder %s21, 1
      %p123 = por %p121, %p122
      %p124 = scmp.ne.s32.totalorder %s115, %s116
      %p125 = scmp.eq.s32.totalorder %s21, 0
      %p126 = por %p124, %p125
      %p127 = scmp.ne.s32.totalorder %s115, %s116
      %p128 = scmp.eq.s32.totalorder %s22, 1
      %p129 = por %p127, %p128
      %p131 = scmp.ne.s32.totalorder %s116, %s130
      %p132 = scmp.eq.s32.totalorder %s22, 0
      %p133 = por %p131, %p132
      %s135 = sadd.s32 %s134, 1
      %p138 = scmp.eq.s32.totalorder %s16, 1
      %p139 = scmp.ne.s32.totalorder %s134, %s136
      %p140 = scmp.eq.s32.totalorder %s16, 0
      %p141 = por %p139, %p140
      %p142 = scmp.ne.s32.totalorder %s134, %s136
      %p143 = scmp.eq.s32.totalorder %s21, 1
      %p144 = por %p142, %p143
      %p145 = scmp.ne.s32.totalorder %s136, %s137
      %p146 = scmp.eq.s32.totalorder %s21, 0
      %p147 = por %p145, %p146
      %p148 = scmp.ne.s32.totalorder %s136, %s137
      %p149 = scmp.eq.s32.totalorder %s22, 1
      %p150 = por %p148, %p149
      %p152 = scmp.ne.s32.totalorder %s137, %s151
      %p153 = scmp.eq.s32.totalorder %s22, 0
      %p154 = por %p152, %p153
      %s156 = sadd.s32 %s155, 1
      %p159 = scmp.eq.s32.totalorder %s16, 1
      %p160 = scmp.ne.s32.totalorder %s155, %s157
      %p161 = scmp.eq.s32.totalorder %s16, 0
      %p162 = por %p160, %p161
      %p163 = scmp.ne.s32.totalorder %s155, %s157
      %p164 = scmp.eq.s32.totalorder %s21, 1
      %p165 = por %p163, %p164
      %p166 = scmp.ne.s32.totalorder %s157, %s158
      %p167 = scmp.eq.s32.totalorder %s21, 0
      %p168 = por %p166, %p167
      %p169 = scmp.ne.s32.totalorder %s157, %s158
      %p170 = scmp.eq.s32.totalorder %s22, 1
      %p171 = por %p169, %p170
      %p173 = scmp.ne.s32.totalorder %s158, %s172
      %p174 = scmp.eq.s32.totalorder %s22, 0
      %p175 = por %p173, %p174
      %s176 = ssub.s32 %s16, %s23
      %p177 = scmp.eq.s32.totalorder %s176, 0
      %s179 = sadd.s32 %s178, 1
      %s180 = scalar_select %p177, %s178, %s179
      %p183 = pneg %p177
      %p184 = scmp.eq.s32.totalorder %s16, 1
      %p185 = por %p183, %p184
      %p186 = scmp.ne.s32.totalorder %s178, %s181
      %p187 = scmp.eq.s32.totalorder %s16, 0
      %p188 = por %p186, %p187
      %p189 = scmp.ne.s32.totalorder %s178, %s181
      %p190 = scmp.eq.s32.totalorder %s21, 1
      %p191 = por %p189, %p190
      %p192 = scmp.ne.s32.totalorder %s181, %s182
      %p193 = scmp.eq.s32.totalorder %s21, 0
      %p194 = por %p192, %p193
      %p195 = scmp.ne.s32.totalorder %s181, %s182
      %p196 = scmp.eq.s32.totalorder %s22, 1
      %p197 = por %p195, %p196
      %p199 = scmp.ne.s32.totalorder %s182, %s198
      %p200 = scmp.eq.s32.totalorder %s22, 0
      %p201 = por %p199, %p200
      %p202 = scmp.le.s32.totalorder 1, %s16
      %p203 = scmp.lt.s32.totalorder %s16, 3
      %p204 = pnand %p202, %p203
      %p205 = pneg %p204
      // Predicated region
      $region9: #{tpu_custom_call.1} parent=5 // pred_check
        _
      $region10: #{tpu_custom_call.1} parent=5 // pred_check_branch
        %207 = sbr.rel (%p204) target = $region12
      $region11: #{tpu_custom_call.1} parent=5 // pred_region
        %s208 = ssub.s32 %s16, 1
        // Predicated region
        $region13: #{tpu_custom_call.1} parent=11 // pred_check
          %p209 = pneg %p63
        $region14: #{tpu_custom_call.1} parent=11 // pred_check_branch
          %211 = sbr.rel (%p209) target = $region16
        $region15: #{tpu_custom_call.1} parent=11 // pred_region
          _
        $region16: #{tpu_custom_call.1} parent=11 // pred_fallthru
          _
        // Predicated region
        $region17: #{tpu_custom_call.1} parent=11 // pred_check
          %p212 = pneg %p84
        $region18: #{tpu_custom_call.1} parent=11 // pred_check_branch
          %214 = sbr.rel (%p212) target = $region20
        $region19: #{tpu_custom_call.1} parent=11 // pred_region
          _
        $region20: #{tpu_custom_call.1} parent=11 // pred_fallthru
          _
        // Predicated region
        $region21: #{tpu_custom_call.1} parent=11 // pred_check
          %p215 = pneg %p105
        $region22: #{tpu_custom_call.1} parent=11 // pred_check_branch
          %217 = sbr.rel (%p215) target = $region24
        $region23: #{tpu_custom_call.1} parent=11 // pred_region
          _
        $region24: #{tpu_custom_call.1} parent=11 // pred_fallthru
          _
        // Predicated region
        $region25: #{tpu_custom_call.1} parent=11 // pred_check
          %p218 = pneg %p126
        $region26: #{tpu_custom_call.1} parent=11 // pred_check_branch
          %220 = sbr.rel (%p218) target = $region28
        $region27: #{tpu_custom_call.1} parent=11 // pred_region
          _
        $region28: #{tpu_custom_call.1} parent=11 // pred_fallthru
          _
        // Predicated region
        $region29: #{tpu_custom_call.1} parent=11 // pred_check
          %p221 = pneg %p147
        $region30: #{tpu_custom_call.1} parent=11 // pred_check_branch
          %223 = sbr.rel (%p221) target = $region32
        $region31: #{tpu_custom_call.1} parent=11 // pred_region
          _
        $region32: #{tpu_custom_call.1} parent=11 // pred_fallthru
          _
        // Predicated region
        $region33: #{tpu_custom_call.1} parent=11 // pred_check
          %p224 = pneg %p168
        $region34: #{tpu_custom_call.1} parent=11 // pred_check_branch
          %226 = sbr.rel (%p224) target = $region36
        $region35: #{tpu_custom_call.1} parent=11 // pred_region
          _
        $region36: #{tpu_custom_call.1} parent=11 // pred_fallthru
          _
      $region12: #{tpu_custom_call.1} parent=5 // pred_fallthru
        _
      %p227 = scmp.lt.s32.totalorder %s16, 2
      // Predicated region
      $region37: #{tpu_custom_call.1} parent=5 // pred_check
        %p228 = pneg %p227
      $region38: #{tpu_custom_call.1} parent=5 // pred_check_branch
        %230 = sbr.rel (%p228) target = $region40
      $region39: #{tpu_custom_call.1} parent=5 // pred_region
        // Predicated region
        $region41: #{tpu_custom_call.1} parent=39 // pred_check
          %p231 = pneg %p36
        $region42: #{tpu_custom_call.1} parent=39 // pred_check_branch
          %233 = sbr.rel (%p231) target = $region44
        $region43: #{tpu_custom_call.1} parent=39 // pred_region
          %p234 = scmp.lt.s32.totalorder %s16, 1
          %s235 = scalar_select %p234, %s16, 1
          %s236 = smul.addr %s235, 4
          %s237 = smul.addr %s236, 8
          %s238 = scalar_lea.vmem %s0, %s237
        $region44: #{tpu_custom_call.1} parent=39 // pred_fallthru
          _
      $region40: #{tpu_custom_call.1} parent=5 // pred_fallthru
        _
      %p239 = scmp.le.s32.totalorder 1, %s16
      %p240 = scmp.lt.s32.totalorder %s16, 3
      %p241 = pnand %p239, %p240
      %p242 = pneg %p241
      // Predicated region
      $region45: #{tpu_custom_call.1} parent=5 // pred_check
        _
      $region46: #{tpu_custom_call.1} parent=5 // pred_check_branch
        %244 = sbr.rel (%p241) target = $region48
      $region47: #{tpu_custom_call.1} parent=5 // pred_region
        %s245 = ssub.s32 %s16, 1
        %p246 = scmp.lt.s32.totalorder %s21, 1
        %s247 = scalar_select %p246, %s21, 1
        %s248 = smul.addr %s247, 4
        %s249 = smul.addr %s248, 8
        %s250 = scalar_lea.vmem %s0, %s249
        %p251 = pneg %p42
        %p252 = pneg %p39
        %p253 = pneg %p63
        %p254 = pneg %p60
        %p255 = pneg %p84
        %p256 = pneg %p81
        %p257 = pneg %p105
        %p258 = pneg %p102
        %p259 = pneg %p126
        %p260 = pneg %p123
        %p261 = pneg %p147
        %p262 = pneg %p144
        %p263 = pneg %p168
        %p264 = pneg %p165
        %p265 = pneg %p194
        %p266 = pneg %p191
        %s267 = sand.u32 %s181, 1
        %s268 = scalar_lea.sflag [#allocation4], %s267
        %s269 = sand.u32 %s181, 1
        %s270 = smul.addr %s269, 32
        %s271 = scalar_lea.vmem [#allocation3], %s270
        %p272 = scmp.lt.s32.totalorder %s21, 1
        %s273 = scalar_select %p272, %s21, 1
        %s274 = smul.addr %s273, 4
        %s275 = smul.addr %s274, 8
        %s276 = scalar_lea.vmem %s0, %s275
        %277 = vst [vmem:[#allocation2] sm:$0xff] 0.0
        %278 = vst [vmem:[#allocation2 + $0x20] sm:$0xff] 0.0
        %279 = vst [vmem:[#allocation2 + $0x40] sm:$0xff] 0.0
        %280 = vst [vmem:[#allocation2 + $0x60] sm:$0xff] 0.0
        %281 = vst [vmem:[#allocation2 + $0x80] sm:$0xff] 0.0
        %282 = vst [vmem:[#allocation2 + $0xa0] sm:$0xff] 0.0
        %283 = vst [vmem:[#allocation2 + $0xc0] sm:$0xff] 0.0
        %284 = vst [vmem:[#allocation2 + $0xe0] sm:$0xff] 0.0
        %285 = vst [vmem:[#allocation2 + $0x100] sm:$0xff] 0.0
        %286 = vst [vmem:[#allocation2 + $0x18] sm:$0xff] 0.0
        %287 = vst [vmem:[#allocation2 + $0x38] sm:$0xff] 0.0
        %288 = vst [vmem:[#allocation2 + $0x58] sm:$0xff] 0.0
        %289 = vst [vmem:[#allocation2 + $0x78] sm:$0xff] 0.0
        %290 = vst [vmem:[#allocation2 + $0x98] sm:$0xff] 0.0
        %291 = vst [vmem:[#allocation2 + $0xb8] sm:$0xff] 0.0
        %292 = vst [vmem:[#allocation2 + $0xd8] sm:$0xff] 0.0
        %293 = vst [vmem:[#allocation2 + $0xf8] sm:$0xff] 0.0
        %294 = vst [vmem:[#allocation2 + $0x118] sm:$0xff] 0.0
        %v295 = vlaneseq
        %v296 = vand.u32 %v295, 127
        %v297 = vadd.s32 %v296, 128
        %vm298 = vcmp.lt.s32.totalorder %v296, 0
        %v299 = vsub.s32 0, %v296
        %v300 = vsel %vm298, %v299, %v296
        %v301 = vshrl.u32 %v300, 4
        %v302 = vand.u32 %v300, 15
        %v303 = vsub.s32 0, %v302
        %v304 = vsel %vm298, %v303, %v302
        %vm305 = vcmp.lt.s32.totalorder %v297, 0
        %v306 = vsub.s32 0, %v297
        %v307 = vsel %vm305, %v306, %v297
        %v308 = vshrl.u32 %v307, 4
        %v309 = vand.u32 %v307, 15
        %v310 = vsub.s32 0, %v309
        %v311 = vsel %vm305, %v310, %v309
        %vm312 = vcmp.ne.s32.totalorder %v304, 0
        %vm313 = vcmp.ne.s32.totalorder %v311, 0
        %vm314 = vcmp.lt.s32.totalorder %v304, 0
        %vm315 = vcmp.lt.s32.totalorder %v311, 0
        %vm316 = vmand %vm314, %vm312
        %vm317 = vmand %vm315, %vm313
        %v318 = vadd.s32 %v304, 16
        %v319 = vadd.s32 %v311, 16
        %v320 = vsel %vm316, %v318, %v304
        %v321 = vsel %vm317, %v319, %v311
        %vm322 = vcmp.ne.s32.totalorder %v320, 0
        %vm323 = vcmp.ne.s32.totalorder %v321, 0
        %vm324 = vcmp.ne.s32.totalorder %v320, 15
        %vm325 = vcmp.ne.s32.totalorder %v321, 15
        %v326 = vld [vmem:[%s276] sm:$0xff]
        %v327 = vld [vmem:[%s276 + $0x8] sm:$0xff]
        %v328 = vld [vmem:[%s276 + $0x10] sm:$0xff]
        %v329 = vld [vmem:[%s276 + $0x18] sm:$0xff]
        %v330 = vld [vmem:[%s1] sm:$0xff]
        %v331 = vld [vmem:[%s2] sm:$0xff]
        %333 = vset.pattern.permute.xlu0 0
        %334 = vperm.xlu0 %333, %v331
        %v335 = vpop.permute.xlu0 %334
        %vm337 = vcmask 130048
        %v339 = vsel %vm337, %v330, 0
        %341 = vmatprep.subr.mxu0 %v327
        %342 = vmatpush1.msra.mxu0 %v326
        %343 = vmatprep.subr.mxu0 %v329
        %344 = vmatpush1.msra.mxu0 %v328
        %345 = vmatprep.subr.mxu0 0.0
        %346 = vmatpush1.msra.mxu0 0.0
        %347 = vmatprep.subr.mxu0 0.0
        %348 = vmatpush1.msra.mxu0 0.0
        %349 = vmatprep.subr.mxu0 0.0
        %350 = vmatpush1.msra.mxu0 0.0
        %351 = vmatprep.subr.mxu0 0.0
        %352 = vmatpush1.msra.mxu0 0.0
        %353 = vmatprep.subr.mxu0 0.0
        %354 = vmatpush1.msra.mxu0 0.0
        %355 = vmatprep.subr.mxu0 0.0
        %356 = vmatpush1.msra.mxu0 0.0
        %357 = vmatprep.subr.mxu0 0.0
        %358 = vmatpush1.msra.mxu0 0.0
        %359 = vmatprep.subr.mxu0 0.0
        %360 = vmatpush1.msra.mxu0 0.0
        %361 = vmatprep.subr.mxu0 0.0
        %362 = vmatpush1.msra.mxu0 0.0
        %363 = vmatprep.subr.mxu0 0.0
        %364 = vmatpush1.msra.mxu0 0.0
        %365 = vmatprep.subr.mxu0 0.0
        %366 = vmatpush1.msra.mxu0 0.0
        %367 = vmatprep.subr.mxu0 0.0
        %368 = vmatpush1.msra.mxu0 0.0
        %369 = vmatprep.subr.mxu0 0.0
        %370 = vmatpush1.msra.mxu0 0.0
        %371 = vmatprep.subr.mxu0 0.0
        %372 = vmatpush1.msra.mxu0 0.0
        %373 = vmatprep.subr.mxu0 0.0
        %374 = vmatpush1.msra.mxu0 0.0
        %375 = vmatprep.subr.mxu0 0.0
        %376 = vmatpush1.msra.mxu0 0.0
        %377 = vmatprep.subr.mxu0 0.0
        %378 = vmatpush1.msra.mxu0 0.0
        %379 = vmatprep.subr.mxu0 0.0
        %380 = vmatpush1.msra.mxu0 0.0
        %381 = vmatprep.subr.mxu0 0.0
        %382 = vmatpush1.msra.mxu0 0.0
        %383 = vmatprep.subr.mxu0 0.0
        %384 = vmatpush1.msra.mxu0 0.0
        %385 = vmatprep.subr.mxu0 0.0
        %386 = vmatpush1.msra.mxu0 0.0
        %387 = vmatprep.subr.mxu0 0.0
        %388 = vmatpush1.msra.mxu0 0.0
        %389 = vmatprep.subr.mxu0 0.0
        %390 = vmatpush1.msra.mxu0 0.0
        %391 = vmatprep.subr.mxu0 0.0
        %392 = vmatpush1.msra.mxu0 0.0
        %393 = vmatprep.subr.mxu0 0.0
        %394 = vmatpush1.msra.mxu0 0.0
        %395 = vmatprep.subr.mxu0 0.0
        %396 = vmatpush1.msra.mxu0 0.0
        %397 = vmatprep.subr.mxu0 0.0
        %398 = vmatpush1.msra.mxu0 0.0
        %399 = vmatprep.subr.mxu0 0.0
        %400 = vmatpush1.msra.mxu0 0.0
        %401 = vmatprep.subr.mxu0 0.0
        %402 = vmatpush1.msra.mxu0 0.0
        %403 = vmatprep.subr.mxu0 0.0
        %404 = vmatpush1.msra.mxu0 0.0
        %405 = vmatprep.mubr.f32.mxu0 0.0
        %406 = vmatmul.mubr.f32.gmra.mrb[0].mxu0 %v339
        %v407 = vpop.f32.mrb[0].mxu0
        %v408 = vadd.f32 %v335, %v407
        %v409 = vpop.f32.mrb[0].mxu0
        %v410 = vadd.f32 %v335, %v409
        %411 = vdwg.mxu0
        %v412 = vld [vmem:[%s3] sm:$0xff]
        %v413 = vld [vmem:[%s3 + $0x8] sm:$0xff]
        %v414 = vld [vmem:[%s3 + $0x10] sm:$0xff]
        %v415 = vld [vmem:[%s3 + $0x18] sm:$0xff]
        %v416 = vld [vmem:[%s3 + $0x20] sm:$0xff]
        %v417 = vld [vmem:[%s3 + $0x28] sm:$0xff]
        %v418 = vld [vmem:[%s3 + $0x30] sm:$0xff]
        %v419 = vld [vmem:[%s3 + $0x38] sm:$0xff]
        %v420 = vld [vmem:[%s3 + $0x40] sm:$0xff]
        %vm421 = vcmask 64512
        %v423 = vsel %vm421, %v412, 0
        %v426 = vsel %vm421, %v413, 0
        %v429 = vsel %vm421, %v414, 0
        %v432 = vsel %vm421, %v415, 0
        %v435 = vsel %vm421, %v416, 0
        %v438 = vsel %vm421, %v417, 0
        %v441 = vsel %vm421, %v418, 0
        %v444 = vsel %vm421, %v419, 0
        %v447 = vsel %vm421, %v420, 0
        %449 = vmatprep.subr.mxu0 %v410
        %450 = vmatpush1.msra.mxu0 %v408
        %451 = vmatprep.subr.mxu0 0.0
        %452 = vmatpush1.msra.mxu0 0.0
        %453 = vmatprep.subr.mxu0 0.0
        %454 = vmatpush1.msra.mxu0 0.0
        %455 = vmatprep.subr.mxu0 0.0
        %456 = vmatpush1.msra.mxu0 0.0
        %457 = vmatprep.subr.mxu0 0.0
        %458 = vmatpush1.msra.mxu0 0.0
        %459 = vmatprep.subr.mxu0 0.0
        %460 = vmatpush1.msra.mxu0 0.0
        %461 = vmatprep.subr.mxu0 0.0
        %462 = vmatpush1.msra.mxu0 0.0
        %463 = vmatprep.subr.mxu0 0.0
        %464 = vmatpush1.msra.mxu0 0.0
        %465 = vmatprep.subr.mxu0 0.0
        %466 = vmatpush1.msra.mxu0 0.0
        %467 = vmatprep.subr.mxu0 0.0
        %468 = vmatpush1.msra.mxu0 0.0
        %469 = vmatprep.subr.mxu0 0.0
        %470 = vmatpush1.msra.mxu0 0.0
        %471 = vmatprep.subr.mxu0 0.0
        %472 = vmatpush1.msra.mxu0 0.0
        %473 = vmatprep.subr.mxu0 0.0
        %474 = vmatpush1.msra.mxu0 0.0
        %475 = vmatprep.subr.mxu0 0.0
        %476 = vmatpush1.msra.mxu0 0.0
        %477 = vmatprep.subr.mxu0 0.0
        %478 = vmatpush1.msra.mxu0 0.0
        %479 = vmatprep.subr.mxu0 0.0
        %480 = vmatpush1.msra.mxu0 0.0
        %481 = vmatprep.subr.mxu0 0.0
        %482 = vmatpush1.msra.mxu0 0.0
        %483 = vmatprep.subr.mxu0 0.0
        %484 = vmatpush1.msra.mxu0 0.0
        %485 = vmatprep.subr.mxu0 0.0
        %486 = vmatpush1.msra.mxu0 0.0
        %487 = vmatprep.subr.mxu0 0.0
        %488 = vmatpush1.msra.mxu0 0.0
        %489 = vmatprep.subr.mxu0 0.0
        %490 = vmatpush1.msra.mxu0 0.0
        %491 = vmatprep.subr.mxu0 0.0
        %492 = vmatpush1.msra.mxu0 0.0
        %493 = vmatprep.subr.mxu0 0.0
        %494 = vmatpush1.msra.mxu0 0.0
        %495 = vmatprep.subr.mxu0 0.0
        %496 = vmatpush1.msra.mxu0 0.0
        %497 = vmatprep.subr.mxu0 0.0
        %498 = vmatpush1.msra.mxu0 0.0
        %499 = vmatprep.subr.mxu0 0.0
        %500 = vmatpush1.msra.mxu0 0.0
        %501 = vmatprep.subr.mxu0 0.0
        %502 = vmatpush1.msra.mxu0 0.0
        %503 = vmatprep.subr.mxu0 0.0
        %504 = vmatpush1.msra.mxu0 0.0
        %505 = vmatprep.subr.mxu0 0.0
        %506 = vmatpush1.msra.mxu0 0.0
        %507 = vmatprep.subr.mxu0 0.0
        %508 = vmatpush1.msra.mxu0 0.0
        %509 = vmatprep.subr.mxu0 0.0
        %510 = vmatpush1.msra.mxu0 0.0
        %511 = vmatprep.subr.mxu0 0.0
        %512 = vmatpush1.msra.mxu0 0.0
        %513 = vmatprep.mubr.f32.mxu0 0.0
        %514 = vmatmul.mubr.f32.gmra.mrb[0].mxu0 %v423
        %v515 = vpop.f32.mrb[0].mxu0
        %v516 = vadd.f32 0.0, %v515
        %v517 = vpop.f32.mrb[0].mxu0
        %v518 = vadd.f32 0.0, %v517
        %519 = vmatprep.mubr.f32.mxu0 0.0
        %520 = vmatmul.mubr.f32.gmra.mrb[0].mxu0 %v426
        %v521 = vpop.f32.mrb[0].mxu0
        %v522 = vadd.f32 0.0, %v521
        %v523 = vpop.f32.mrb[0].mxu0
        %v524 = vadd.f32 0.0, %v523
        %525 = vmatprep.mubr.f32.mxu0 0.0
        %526 = vmatmul.mubr.f32.gmra.mrb[0].mxu0 %v429
        %v527 = vpop.f32.mrb[0].mxu0
        %v528 = vadd.f32 0.0, %v527
        %v529 = vpop.f32.mrb[0].mxu0
        %v530 = vadd.f32 0.0, %v529
        %531 = vmatprep.mubr.f32.mxu0 0.0
        %532 = vmatmul.mubr.f32.gmra.mrb[0].mxu0 %v432
        %v533 = vpop.f32.mrb[0].mxu0
        %v534 = vadd.f32 0.0, %v533
        %v535 = vpop.f32.mrb[0].mxu0
        %v536 = vadd.f32 0.0, %v535
        %537 = vmatprep.mubr.f32.mxu0 0.0
        %538 = vmatmul.mubr.f32.gmra.mrb[0].mxu0 %v435
        %v539 = vpop.f32.mrb[0].mxu0
        %v540 = vadd.f32 0.0, %v539
        %v541 = vpop.f32.mrb[0].mxu0
        %v542 = vadd.f32 0.0, %v541
        %543 = vmatprep.mubr.f32.mxu0 0.0
        %544 = vmatmul.mubr.f32.gmra.mrb[0].mxu0 %v438
        %v545 = vpop.f32.mrb[0].mxu0
        %v546 = vadd.f32 0.0, %v545
        %v547 = vpop.f32.mrb[0].mxu0
        %v548 = vadd.f32 0.0, %v547
        %549 = vmatprep.mubr.f32.mxu0 0.0
        %550 = vmatmul.mubr.f32.gmra.mrb[0].mxu0 %v441
        %v551 = vpop.f32.mrb[0].mxu0
        %v552 = vadd.f32 0.0, %v551
        %v553 = vpop.f32.mrb[0].mxu0
        %v554 = vadd.f32 0.0, %v553
        %555 = vmatprep.mubr.f32.mxu0 0.0
        %556 = vmatmul.mubr.f32.gmra.mrb[0].mxu0 %v444
        %v557 = vpop.f32.mrb[0].mxu0
        %v558 = vadd.f32 0.0, %v557
        %v559 = vpop.f32.mrb[0].mxu0
        %v560 = vadd.f32 0.0, %v559
        %561 = vmatprep.mubr.f32.mxu0 0.0
        %562 = vmatmul.mubr.f32.gmra.mrb[0].mxu0 %v447
        %v563 = vpop.f32.mrb[0].mxu0
        %v564 = vadd.f32 0.0, %v563
        %v565 = vpop.f32.mrb[0].mxu0
        %v566 = vadd.f32 0.0, %v565
        %567 = vdwg.mxu0
        %568 = vst [vmem:[#allocation2 + $0x8] sm:$0xff] %v516
        %569 = vst [vmem:[#allocation2 + $0x10] sm:$0xff] %v518
        %570 = vst [vmem:[#allocation2 + $0x28] sm:$0xff] %v522
        %571 = vst [vmem:[#allocation2 + $0x30] sm:$0xff] %v524
        %572 = vst [vmem:[#allocation2 + $0x48] sm:$0xff] %v528
        %573 = vst [vmem:[#allocation2 + $0x50] sm:$0xff] %v530
        %574 = vst [vmem:[#allocation2 + $0x68] sm:$0xff] %v534
        %575 = vst [vmem:[#allocation2 + $0x70] sm:$0xff] %v536
        %576 = vst [vmem:[#allocation2 + $0x88] sm:$0xff] %v540
        %577 = vst [vmem:[#allocation2 + $0x90] sm:$0xff] %v542
        %578 = vst [vmem:[#allocation2 + $0xa8] sm:$0xff] %v546
        %579 = vst [vmem:[#allocation2 + $0xb0] sm:$0xff] %v548
        %580 = vst [vmem:[#allocation2 + $0xc8] sm:$0xff] %v552
        %581 = vst [vmem:[#allocation2 + $0xd0] sm:$0xff] %v554
        %582 = vst [vmem:[#allocation2 + $0xe8] sm:$0xff] %v558
        %583 = vst [vmem:[#allocation2 + $0xf0] sm:$0xff] %v560
        %584 = vst [vmem:[#allocation2 + $0x108] sm:$0xff] %v564
        %585 = vst [vmem:[#allocation2 + $0x110] sm:$0xff] %v566
        %v586 = vld [vmem:[#allocation2] sm:$0xff]
        %v587 = vld [vmem:[#allocation2 + $0x8] sm:$0xff]
        %v588 = vld [vmem:[#allocation2 + $0x10] sm:$0xff]
        %v589 = vld [vmem:[#allocation2 + $0x60] sm:$0xff]
        %v590 = vld [vmem:[#allocation2 + $0x68] sm:$0xff]
        %v591 = vld [vmem:[#allocation2 + $0x70] sm:$0xff]
        %595 = vrot.lane.b32.xlu0 %v589, 112
        %v596 = vpop.permute.xlu0 %595
        %597 = vrot.lane.b32.xlu0 %v590, 112
        %v598 = vpop.permute.xlu0 %597
        %599 = vrot.lane.b32.xlu0 %v591, 112
        %v600 = vpop.permute.xlu0 %599
        %vm601 = vcmask 916480
        %v602 = vsel %vm601, %v596, %v598
        %v603 = vsel %vm601, %v598, %v600
        %v607 = vadd.f32 %v586, %v602
        %v608 = vadd.f32 %v587, %v603
        %v609 = vadd.f32 %v588, %v600
        %v610 = vld [vmem:[#allocation2 + $0xc8] sm:$0xff]
        %v611 = vld [vmem:[#allocation2 + $0xd0] sm:$0xff]
        %v612 = vld [vmem:[#allocation2 + $0xd8] sm:$0xff]
        %616 = vrot.lane.b32.xlu0 %v610, 96
        %v617 = vpop.permute.xlu0 %616
        %618 = vrot.lane.b32.xlu0 %v611, 96
        %v619 = vpop.permute.xlu0 %618
        %620 = vrot.lane.b32.xlu0 %v612, 96
        %v621 = vpop.permute.xlu0 %620
        %vm622 = vcmask 785408
        %v623 = vsel %vm622, %v617, %v619
        %v624 = vsel %vm622, %v619, %v621
        %v628 = vadd.f32 %v607, %v617
        %v629 = vadd.f32 %v608, %v623
        %v630 = vadd.f32 %v609, %v624
        %v631 = vsel %vm322, 1, 0
        %v632 = vsel %vm323, 1, 0
        %vm633 = vcmp.eq.s32.totalorder %v631, 1
        %vm634 = vcmp.eq.s32.totalorder %v632, 1
        %638 = vrot.lane.b32.xlu0 %v628, 17
        %v639 = vpop.permute.xlu0 %638
        %640 = vrot.lane.b32.xlu0 %v629, 17
        %v641 = vpop.permute.xlu0 %640
        %642 = vrot.lane.b32.xlu0 %v630, 17
        %v643 = vpop.permute.xlu0 %642
        %vm644 = vcmask 138240
        %v645 = vsel %vm644, %v639, %v641
        %v646 = vsel %vm644, %v641, %v643
        %v649 = vsel %vm633, %v645, 0.0
        %v650 = vsel %vm634, %v646, 0.0
        %v651 = vld [vmem:[#allocation2 + $0x20] sm:$0xff]
        %v652 = vld [vmem:[#allocation2 + $0x28] sm:$0xff]
        %v653 = vld [vmem:[#allocation2 + $0x30] sm:$0xff]
        %v654 = vld [vmem:[#allocation2 + $0x88] sm:$0xff]
        %v655 = vld [vmem:[#allocation2 + $0x90] sm:$0xff]
        %658 = vrot.lane.b32.xlu0 %v654, 112
        %v659 = vpop.permute.xlu0 %658
        %660 = vrot.lane.b32.xlu0 %v655, 112
        %v661 = vpop.permute.xlu0 %660
        %v662 = vsel %vm601, %v659, %v661
        %v666 = vadd.f32 %v651, %v659
        %v667 = vadd.f32 %v652, %v662
        %v668 = vadd.f32 %v653, %v661
        %v669 = vld [vmem:[#allocation2 + $0xe8] sm:$0xff]
        %v670 = vld [vmem:[#allocation2 + $0xf0] sm:$0xff]
        %v671 = vld [vmem:[#allocation2 + $0xf8] sm:$0xff]
        %675 = vrot.lane.b32.xlu0 %v669, 96
        %v676 = vpop.permute.xlu0 %675
        %677 = vrot.lane.b32.xlu0 %v670, 96
        %v678 = vpop.permute.xlu0 %677
        %679 = vrot.lane.b32.xlu0 %v671, 96
        %v680 = vpop.permute.xlu0 %679
        %v681 = vsel %vm622, %v676, %v678
        %v682 = vsel %vm622, %v678, %v680
        %v686 = vadd.f32 %v666, %v676
        %v687 = vadd.f32 %v667, %v681
        %v688 = vadd.f32 %v668, %v682
        %692 = vrot.lane.b32.xlu0 %v686, 16
        %v693 = vpop.permute.xlu0 %692
        %694 = vrot.lane.b32.xlu0 %v687, 16
        %v695 = vpop.permute.xlu0 %694
        %696 = vrot.lane.b32.xlu0 %v688, 16
        %v697 = vpop.permute.xlu0 %696
        %v698 = vsel %vm337, %v693, %v695
        %v699 = vsel %vm337, %v695, %v697
        %v702 = vadd.f32 %v649, %v698
        %v703 = vadd.f32 %v650, %v699
        %v704 = vld [vmem:[#allocation2 + $0x40] sm:$0xff]
        %v705 = vld [vmem:[#allocation2 + $0x48] sm:$0xff]
        %v706 = vld [vmem:[#allocation2 + $0x50] sm:$0xff]
        %v707 = vld [vmem:[#allocation2 + $0xa8] sm:$0xff]
        %v708 = vld [vmem:[#allocation2 + $0xb0] sm:$0xff]
        %v709 = vld [vmem:[#allocation2 + $0xb8] sm:$0xff]
        %713 = vrot.lane.b32.xlu0 %v707, 112
        %v714 = vpop.permute.xlu0 %713
        %715 = vrot.lane.b32.xlu0 %v708, 112
        %v716 = vpop.permute.xlu0 %715
        %717 = vrot.lane.b32.xlu0 %v709, 112
        %v718 = vpop.permute.xlu0 %717
        %v719 = vsel %vm601, %v714, %v716
        %v720 = vsel %vm601, %v716, %v718
        %v724 = vadd.f32 %v704, %v714
        %v725 = vadd.f32 %v705, %v719
        %v726 = vadd.f32 %v706, %v720
        %v727 = vld [vmem:[#allocation2 + $0x108] sm:$0xff]
        %v728 = vld [vmem:[#allocation2 + $0x110] sm:$0xff]
        %v729 = vld [vmem:[#allocation2 + $0x118] sm:$0xff]
        %733 = vrot.lane.b32.xlu0 %v727, 96
        %v734 = vpop.permute.xlu0 %733
        %735 = vrot.lane.b32.xlu0 %v728, 96
        %v736 = vpop.permute.xlu0 %735
        %737 = vrot.lane.b32.xlu0 %v729, 96
        %v738 = vpop.permute.xlu0 %737
        %v739 = vsel %vm622, %v734, %v736
        %v740 = vsel %vm622, %v736, %v738
        %v744 = vadd.f32 %v724, %v734
        %v745 = vadd.f32 %v725, %v739
        %v746 = vadd.f32 %v726, %v740
        %v747 = vsel %vm324, 1, 0
        %v748 = vsel %vm325, 1, 0
        %vm749 = vcmp.eq.s32.totalorder %v747, 1
        %vm750 = vcmp.eq.s32.totalorder %v748, 1
        %754 = vrot.lane.b32.xlu0 %v744, 15
        %v755 = vpop.permute.xlu0 %754
        %756 = vrot.lane.b32.xlu0 %v745, 15
        %v757 = vpop.permute.xlu0 %756
        %758 = vrot.lane.b32.xlu0 %v746, 15
        %v759 = vpop.permute.xlu0 %758
        %vm760 = vcmask 121856
        %v761 = vsel %vm760, %v755, %v757
        %v762 = vsel %vm760, %v757, %v759
        %v765 = vsel %vm749, %v761, 0.0
        %v766 = vsel %vm750, %v762, 0.0
        %v767 = vadd.f32 %v702, %v765
        %v768 = vadd.f32 %v703, %v766
        %v769 = vld [vmem:[%s4] sm:$0xff]
        %771 = vset.pattern.permute.xlu0 0
        %772 = vperm.xlu0 %771, %v769
        %v773 = vpop.permute.xlu0 %772
        %v775 = vadd.f32 %v767, %v773
        %v776 = vadd.f32 %v768, %v773
        %v777 = vld [vmem:[%s5] sm:$0xff]
        %v778 = vld [vmem:[%s5 + $0x8] sm:$0xff]
        %v779 = vld [vmem:[%s6] sm:$0xff]
        %v780 = vld [vmem:[%s6 + $0x8] sm:$0xff]
        %782 = vset.pattern.permute.xlu0 0
        %783 = vperm.xlu0 %782, %v779
        %v784 = vpop.permute.xlu0 %783
        %787 = vset.pattern.permute.xlu0 0
        %788 = vperm.xlu0 %787, %v780
        %v789 = vpop.permute.xlu0 %788
        %v792 = vsel %vm421, %v777, 0
        %v795 = vsel %vm421, %v778, 0
        %797 = vmatprep.subr.mxu0 %v776
        %798 = vmatpush1.msra.mxu0 %v775
        %799 = vmatprep.subr.mxu0 0.0
        %800 = vmatpush1.msra.mxu0 0.0
        %801 = vmatprep.subr.mxu0 0.0
        %802 = vmatpush1.msra.mxu0 0.0
        %803 = vmatprep.subr.mxu0 0.0
        %804 = vmatpush1.msra.mxu0 0.0
        %805 = vmatprep.subr.mxu0 0.0
        %806 = vmatpush1.msra.mxu0 0.0
        %807 = vmatprep.subr.mxu0 0.0
        %808 = vmatpush1.msra.mxu0 0.0
        %809 = vmatprep.subr.mxu0 0.0
        %810 = vmatpush1.msra.mxu0 0.0
        %811 = vmatprep.subr.mxu0 0.0
        %812 = vmatpush1.msra.mxu0 0.0
        %813 = vmatprep.subr.mxu0 0.0
        %814 = vmatpush1.msra.mxu0 0.0
        %815 = vmatprep.subr.mxu0 0.0
        %816 = vmatpush1.msra.mxu0 0.0
        %817 = vmatprep.subr.mxu0 0.0
        %818 = vmatpush1.msra.mxu0 0.0
        %819 = vmatprep.subr.mxu0 0.0
        %820 = vmatpush1.msra.mxu0 0.0
        %821 = vmatprep.subr.mxu0 0.0
        %822 = vmatpush1.msra.mxu0 0.0
        %823 = vmatprep.subr.mxu0 0.0
        %824 = vmatpush1.msra.mxu0 0.0
        %825 = vmatprep.subr.mxu0 0.0
        %826 = vmatpush1.msra.mxu0 0.0
        %827 = vmatprep.subr.mxu0 0.0
        %828 = vmatpush1.msra.mxu0 0.0
        %829 = vmatprep.subr.mxu0 0.0
        %830 = vmatpush1.msra.mxu0 0.0
        %831 = vmatprep.subr.mxu0 0.0
        %832 = vmatpush1.msra.mxu0 0.0
        %833 = vmatprep.subr.mxu0 0.0
        %834 = vmatpush1.msra.mxu0 0.0
        %835 = vmatprep.subr.mxu0 0.0
        %836 = vmatpush1.msra.mxu0 0.0
        %837 = vmatprep.subr.mxu0 0.0
        %838 = vmatpush1.msra.mxu0 0.0
        %839 = vmatprep.subr.mxu0 0.0
        %840 = vmatpush1.msra.mxu0 0.0
        %841 = vmatprep.subr.mxu0 0.0
        %842 = vmatpush1.msra.mxu0 0.0
        %843 = vmatprep.subr.mxu0 0.0
        %844 = vmatpush1.msra.mxu0 0.0
        %845 = vmatprep.subr.mxu0 0.0
        %846 = vmatpush1.msra.mxu0 0.0
        %847 = vmatprep.subr.mxu0 0.0
        %848 = vmatpush1.msra.mxu0 0.0
        %849 = vmatprep.subr.mxu0 0.0
        %850 = vmatpush1.msra.mxu0 0.0
        %851 = vmatprep.subr.mxu0 0.0
        %852 = vmatpush1.msra.mxu0 0.0
        %853 = vmatprep.subr.mxu0 0.0
        %854 = vmatpush1.msra.mxu0 0.0
        %855 = vmatprep.subr.mxu0 0.0
        %856 = vmatpush1.msra.mxu0 0.0
        %857 = vmatprep.subr.mxu0 0.0
        %858 = vmatpush1.msra.mxu0 0.0
        %859 = vmatprep.subr.mxu0 0.0
        %860 = vmatpush1.msra.mxu0 0.0
        %861 = vmatprep.mubr.f32.mxu0 0.0
        %862 = vmatmul.mubr.f32.gmra.mrb[0].mxu0 %v792
        %v863 = vpop.f32.mrb[0].mxu0
        %v864 = vadd.f32 %v784, %v863
        %v865 = vpop.f32.mrb[0].mxu0
        %v866 = vadd.f32 %v784, %v865
        %867 = vmatprep.mubr.f32.mxu0 0.0
        %868 = vmatmul.mubr.f32.gmra.mrb[0].mxu0 %v795
        %v869 = vpop.f32.mrb[0].mxu0
        %v870 = vadd.f32 %v789, %v869
        %v871 = vpop.f32.mrb[0].mxu0
        %v872 = vadd.f32 %v789, %v871
        %873 = vdwg.mxu0
        %v874 = vadd.f32 %v864, %v326
        %v875 = vadd.f32 %v866, %v327
        %v876 = vadd.f32 %v870, %v328
        %v877 = vadd.f32 %v872, %v329
        %v878 = vmax.f32 %v874, 0.0
        %v879 = vmax.f32 %v875, 0.0
        %v880 = vmax.f32 %v876, 0.0
        %v881 = vmax.f32 %v877, 0.0
        %882 = vst [vmem:[%s271] sm:$0xff] %v878
        %883 = vst [vmem:[%s271 + $0x8] sm:$0xff] %v879
        %884 = vst [vmem:[%s271 + $0x10] sm:$0xff] %v880
        %885 = vst [vmem:[%s271 + $0x18] sm:$0xff] %v881
        %s886 = sand.u32 %s181, 1
        %s887 = scalar_lea.sflag [#allocation4], %s886
        %s888 = sand.u32 %s181, 1
        %s889 = smul.addr %s888, 32
        %s890 = scalar_lea.vmem [#allocation3], %s889
        // Predicated region
        $region49: #{tpu_custom_call.1} parent=47 // pred_check
          %p891 = pneg %p191
        $region50: #{tpu_custom_call.1} parent=47 // pred_check_branch
          %893 = sbr.rel (%p891) target = $region52
        $region51: #{tpu_custom_call.1} parent=47 // pred_region
          %s895 = ssub.s32 512, 512
          %896 = vsyncadd %s887, %s895
          %s897 = smul.addr %s21, 4
          %s898 = smul.addr %s897, 128
          %s899 = scalar_lea.hbm %s7, %s898
          %s900 = sshll.u32 %s890, 4
          %s901 = int_to_ptr.vmem [resolvable:$true] %s900
          %906 = dma.vmem_to_hbm [thread:$0]  %s901, 512, %s899, %s887, 256, 256, 16
        $region52: #{tpu_custom_call.1} parent=47 // pred_fallthru
          _
      $region48: #{tpu_custom_call.1} parent=5 // pred_fallthru
        _
      %p907 = scmp.le.s32.totalorder 2, %s16
      // Predicated region
      $region53: #{tpu_custom_call.1} parent=5 // pred_check
        %p908 = pneg %p907
      $region54: #{tpu_custom_call.1} parent=5 // pred_check_branch
        %910 = sbr.rel (%p908) target = $region56
      $region55: #{tpu_custom_call.1} parent=5 // pred_region
        %s911 = ssub.s32 %s16, 2
        // Predicated region
        $region57: #{tpu_custom_call.1} parent=55 // pred_check
          %p912 = pneg %p197
        $region58: #{tpu_custom_call.1} parent=55 // pred_check_branch
          %914 = sbr.rel (%p912) target = $region60
        $region59: #{tpu_custom_call.1} parent=55 // pred_region
          %s915 = sand.u32 %s182, 1
          %s916 = scalar_lea.sflag [#allocation4], %s915
          %s917 = sand.u32 %s182, 1
          %s918 = smul.addr %s917, 32
          %s919 = scalar_lea.vmem [#allocation3], %s918
          %920 = dma.done %s916, 512
        $region60: #{tpu_custom_call.1} parent=55 // pred_fallthru
          _
      $region56: #{tpu_custom_call.1} parent=5 // pred_fallthru
        _
    $region6: #{tpu_custom_call.1} parent=1 // loop_footer
      %s20 = sadd.s32 1, %s16
    $region7: #{tpu_custom_call.1} parent=1 // loop_footer_branch
      %15 = sbr.rel target = $region3
    $region8: #{tpu_custom_call.1} parent=1 // loop_exit
      _
    %921 = vsyncpa [#allocation4], 1
    %s922 = scalar_lea.sflag [#allocation4], 1
    %923 = vsyncpa %s922, 1

</llo_original>
